<compile_context>
chip_gen: v5e
topology: v5e:2x2
jax: 0.10.0
libtpu: 0.0.40
codegen_flags: <defaults>
</compile_context>

<pallas_src>
import numpy as np

import jax
import jax.numpy as jnp
from jax.experimental import pallas as pl
from jax.experimental.pallas import tpu as pltpu


# ----------------------------------------------------------------------------
# Trace-time (numpy) bilinear interpolation matrices
# (PyTorch F.interpolate / nn.Upsample, mode='bilinear', align_corners=False)
# ----------------------------------------------------------------------------
def _np_bilinear_matrix(out_size, in_size):
    if out_size == in_size:
        return np.eye(out_size, dtype=np.float32)
    dst = np.arange(out_size, dtype=np.float64)
    src = (dst + 0.5) * (in_size / out_size) - 0.5
    src = np.clip(src, 0.0, in_size - 1.0)
    lo = np.floor(src).astype(np.int64)
    hi = np.minimum(lo + 1, in_size - 1)
    w_hi = (src - lo).astype(np.float32)
    w_lo = (1.0 - w_hi).astype(np.float32)
    R = np.zeros((out_size, in_size), np.float32)
    rows = np.arange(out_size)
    np.add.at(R, (rows, lo), w_lo)
    np.add.at(R, (rows, hi), w_hi)
    return R


def _np_upsample_matrix(n, hb, wb, hs, ws):
    """Block-diagonal (n*hs*ws, n*hb*wb) matrix so that
    flat_small(C, n*hs*ws) @ RT == flat bilinear-upsampled(C, n*hb*wb),
    batched over n.  Keeps the kernel free of in-VMEM reshapes/relayouts."""
    rh = _np_bilinear_matrix(hb, hs)                   # (hb, hs)
    rw = _np_bilinear_matrix(wb, ws)                   # (wb, ws)
    rt = np.kron(rh, rw).T.astype(np.float32)          # (hs*ws, hb*wb)
    return np.kron(np.eye(n, dtype=np.float32), rt)    # (n*hs*ws, n*hb*wb)


# ----------------------------------------------------------------------------
# Parameter construction (deterministic; conv bias=False, BN folded into weights)
# ----------------------------------------------------------------------------
def make_conv_bn_relu_params(key, cin, cout):
    k1, k2, k3, k4 = jax.random.split(key, 4)
    w = 0.1 * jax.random.normal(k1, (cin, cout), jnp.float32)
    gamma = 1.0 + 0.1 * jax.random.normal(k2, (cout,), jnp.float32)
    beta = 0.1 * jax.random.normal(k3, (cout,), jnp.float32)
    running_mean = 0.1 * jax.random.normal(k4, (cout,), jnp.float32)
    running_var = jnp.ones((cout,), jnp.float32)
    scale = gamma / jnp.sqrt(running_var + 1e-5)
    bias = beta - running_mean * scale
    # Channel-major, BN-folded: y = (scale ⊙ W^T) @ x + bias
    w_cm = w.T * scale[:, None]                        # (cout, cin)
    b_cm = bias[:, None]                               # (cout, 1)
    return (w_cm, b_cm)


def make_merge_cell_params(key, inp_1, inp_2, agg_size, repeats=1):
    keys = jax.random.split(key, 2 * repeats + 2)
    return {
        "op_1": [make_conv_bn_relu_params(keys[r], inp_1, inp_1)
                 for r in range(repeats)],
        "op_2": [make_conv_bn_relu_params(keys[repeats + r], inp_2, inp_2)
                 for r in range(repeats)],
        "branch_1": make_conv_bn_relu_params(keys[-2], inp_1, agg_size),
        "branch_2": make_conv_bn_relu_params(keys[-1], inp_2, agg_size),
    }


# ----------------------------------------------------------------------------
# Host-side packing: all layers -> one (L, Cpad, Cpad) tensor, bias folded via a
# constant "ones" input channel at row Cpad-1 (intermediate layers propagate it).
# ----------------------------------------------------------------------------
def _pack_params(params):
    layers = (list(params["op_1"]) + [params["branch_1"]]
              + list(params["op_2"]) + [params["branch_2"]])
    n_chain1 = len(params["op_1"]) + 1
    final_ids = {len(params["op_1"]), len(layers) - 1}   # branch_1 / branch_2 slots

    need = 8
    for l, (w, _b) in enumerate(layers):
        cout, cin = w.shape
        need = max(need, cout, cin + 1)
        if l not in final_ids:                           # must carry the ones channel
            need = max(need, cout + 1)
    cpad = int(-(-need // 8) * 8)                        # round up to sublane multiple
    ones_idx = cpad - 1

    packed = np.zeros((len(layers), cpad, cpad), np.float32)
    for l, (w, b) in enumerate(layers):
        w = np.asarray(w)
        b = np.asarray(b)
        cout, cin = w.shape
        packed[l, :cout, :cin] = w
        packed[l, :cout, ones_idx] = b[:, 0]             # bias via the ones channel
        if l not in final_ids:
            packed[l, ones_idx, :] = 0.0
            packed[l, ones_idx, ones_idx] = 1.0          # keep ones channel == 1
    return packed, cpad, n_chain1


# ----------------------------------------------------------------------------
# Fused MergeCell kernel: both conv chains + upsample + residual add, one step.
# ----------------------------------------------------------------------------
def _make_fused_kernel(n_chain1, n_chain2, agg, upsample):
    """upsample: 0 = equal sizes, 1 = branch-1 is small, 2 = branch-2 is small."""

    def kernel(*refs):
        if upsample != 0:
            x1_ref, x2_ref, w_ref, rt_ref, out_ref = refs
        else:
            x1_ref, x2_ref, w_ref, out_ref = refs
            rt_ref = None

        # 1x1 conv (BN + bias folded into the packed weight) + ReLU, channel-major:
        #   (Cpad, Cpad)bf16 @ (Cpad, N*H*W)bf16 -> f32; ReLU in f32 on the VPU.
        def chain(x_ref, start, count):
            v = x_ref[...]                               # (Cpad, N*H*W) bf16
            y = None
            for i in range(count):
                y = jnp.dot(w_ref[start + i], v,
                            preferred_element_type=jnp.float32)
                y = jnp.maximum(y, 0.0)
                v = y.astype(jnp.bfloat16)
            return y, v                                  # (f32, bf16) final activation

        v1_f32, v1_bf = chain(x1_ref, 0, n_chain1)
        v2_f32, v2_bf = chain(x2_ref, n_chain1, n_chain2)

        if upsample == 0:
            out = v1_f32[:agg] + v2_f32[:agg]
        elif upsample == 2:                              # branch-2 small: upsample it
            up = jnp.dot(v2_bf[:agg], rt_ref[...],
                         preferred_element_type=jnp.float32)
            out = v1_f32[:agg] + up
        else:                                            # branch-1 small: upsample it
            up = jnp.dot(v1_bf[:agg], rt_ref[...],
                         preferred_element_type=jnp.float32)
            out = v2_f32[:agg] + up

        out_ref[...] = out.astype(out_ref.dtype)         # lane-dense (agg, N*Hb*Wb)

    return kernel


# ----------------------------------------------------------------------------
# Forward factory: closes over packed (bf16) weights and static sizes.
# Inputs / outputs are PyTorch-style NCHW.
# ----------------------------------------------------------------------------
def make_merge_cell_forward(params):
    w_packed_np, cpad, n_chain1 = _pack_params(params)
    n_layers = w_packed_np.shape[0]
    n_chain2 = n_layers - n_chain1
    agg = params["branch_1"][0].shape[0]
    w_packed = jnp.asarray(w_packed_np, jnp.bfloat16)

    def forward(x1_nchw, x2_nchw):
        N, C1, H1, W1 = x1_nchw.shape
        N2, C2, H2, W2 = x2_nchw.shape
        assert N == N2

        s1, s2 = (H1, W1), (H2, W2)
        # Same lexicographic comparison as the PyTorch original; guard against mixed
        # dominance (e.g. H1>H2 but W1<W2) where that comparison diverges from F.interpolate.
        if not (s1 == s2 or (H1 >= H2 and W1 >= W2) or (H1 <= H2 and W1 <= W2)):
            raise ValueError("mixed spatial dominance between inputs is not supported")

        if s1 > s2:
            upsample, (Hb, Wb), (Hs, Ws) = 2, s1, s2
        elif s1 < s2:
            upsample, (Hb, Wb), (Hs, Ws) = 1, s2, s1
        else:
            upsample, (Hb, Wb), (Hs, Ws) = 0, s1, s1

        def to_channel_major(x, C, H, W):
            # (N,C,H,W) -> (C, N*H*W): one cheap XLA transpose; pad channel rows to
            # cpad (zeros) plus the constant "ones" bias row; cast to bf16.
            xm = jnp.transpose(x, (1, 0, 2, 3)).reshape(C, N * H * W)
            rows = [xm.astype(jnp.bfloat16)]
            if cpad - 1 - C > 0:
                rows.append(jnp.zeros((cpad - 1 - C, N * H * W), jnp.bfloat16))
            rows.append(jnp.ones((1, N * H * W), jnp.bfloat16))
            return jnp.concatenate(rows, axis=0)

        x1_cm = to_channel_major(x1_nchw, C1, H1, W1)     # (cpad, N*H1*W1)
        x2_cm = to_channel_major(x2_nchw, C2, H2, W2)     # (cpad, N*H2*W2)

        inputs = [x1_cm, x2_cm, w_packed]
        in_specs = [
            pl.BlockSpec((cpad, N * H1 * W1), lambda i: (0, 0)),
            pl.BlockSpec((cpad, N * H2 * W2), lambda i: (0, 0)),
            pl.BlockSpec((n_layers, cpad, cpad), lambda i: (0, 0, 0)),
        ]

        if upsample != 0:
            rt_np = _np_upsample_matrix(N, Hb, Wb, Hs, Ws)
            if rt_np.size * 2 > 8 * 1024 * 1024:
                # TODO(synk): separable row/col interpolation for large maps (v7x VMEM).
                raise NotImplementedError("upsample matrix too large; use separable path")
            rt = jnp.asarray(rt_np, jnp.bfloat16)
            inputs.append(rt)
            in_specs.append(pl.BlockSpec(rt.shape, lambda i: (0, 0)))

        kernel = _make_fused_kernel(n_chain1, n_chain2, agg, upsample)

        out2d = pl.pallas_call(
            kernel,
            out_shape=jax.ShapeDtypeStruct((agg, N * Hb * Wb), x1_nchw.dtype),
            grid_spec=pltpu.PrefetchScalarGridSpec(
                num_scalar_prefetch=0,
                grid=(1,),                               # whole batch fused in one step
                in_specs=in_specs,
                out_specs=pl.BlockSpec((agg, N * Hb * Wb), lambda i: (0, 0)),
            ),
            compiler_params=pltpu.CompilerParams(
                dimension_semantics=("arbitrary",)),
        )(*inputs)

        # (agg, N*Hb*Wb) -> NCHW
        return out2d.reshape(agg, N, Hb, Wb).transpose(1, 0, 2, 3)

    return forward


# ----------------------------------------------------------------------------
# Pure-JAX f32 reference (same math, no Pallas) for a sanity check
# ----------------------------------------------------------------------------
def merge_cell_reference(params, x1_nchw, x2_nchw):
    def cbr(x, w, b):
        y = jnp.einsum('oc,nchw->nohw', w, x) + b[None, :, :, None]
        return jnp.maximum(y, 0.0)

    x1, x2 = x1_nchw, x2_nchw
    for (w, b) in params["op_1"]:
        x1 = cbr(x1, w, b)
    for (w, b) in params["op_2"]:
        x2 = cbr(x2, w, b)
    x1 = cbr(x1, *params["branch_1"])
    x2 = cbr(x2, *params["branch_2"])

    s1, s2 = tuple(x1.shape[2:]), tuple(x2.shape[2:])
    if s1 > s2:
        big, small = x1, x2
    elif s1 < s2:
        big, small = x2, x1
    else:
        return x1 + x2
    rh = jnp.asarray(_np_bilinear_matrix(big.shape[2], small.shape[2]))
    rw = jnp.asarray(_np_bilinear_matrix(big.shape[3], small.shape[3]))
    up = jnp.einsum('ph,nchw->ncpw', rh, small)
    up = jnp.einsum('qw,ncpw->ncpq', rw, up)
    return big + up


if __name__ == "__main__":
    # MergeCell(ctx_config, conn, inps=(4, 6), agg_size=8, ctx_cell=..., repeats=1)
    inp_1, inp_2, agg_size, repeats = 4, 6, 8, 1

    key = jax.random.PRNGKey(0)
    kp, kx1, kx2 = jax.random.split(key, 3)
    params = make_merge_cell_params(kp, inp_1, inp_2, agg_size, repeats)

    # x1 at higher resolution than x2 -> x2 gets bilinearly upsampled.
    x1 = jax.random.normal(kx1, (2, inp_1, 16, 16), jnp.float32)  # NCHW
    x2 = jax.random.normal(kx2, (2, inp_2, 8, 8), jnp.float32)    # NCHW

    fwd = jax.jit(make_merge_cell_forward(params))
    out = jax.block_until_ready(fwd(x1, x2))

    ref = merge_cell_reference(params, x1, x2)
    assert out.shape == (2, agg_size, 16, 16), out.shape
    max_err = float(jnp.max(jnp.abs(out - ref)))
    # bf16 MXU operands (f32 accumulation) -> tolerance loosened vs the f32 reference.
    assert jnp.allclose(out, ref, atol=2e-2, rtol=2e-2), f"mismatch vs reference (max abs err {max_err})"

    print("KERNEL_OK")
</pallas_src>

<mosaic_0001>
module attributes {stable_mosaic.version = 11 : i64} {
  func.func @kernel(%arg0: i32, %arg1: memref<8x512xbf16, #tpu.memory_space<vmem>>, %arg2: memref<8x128xbf16, #tpu.memory_space<vmem>>, %arg3: memref<4x8x8xbf16, #tpu.memory_space<vmem>>, %arg4: memref<128x512xbf16, #tpu.memory_space<vmem>>, %arg5: memref<8x512xf32, #tpu.memory_space<vmem>>) attributes {dimension_semantics = [#tpu.dimension_semantics<arbitrary>], iteration_bounds = array<i64: 1>, scalar_prefetch = 0 : i64, scratch_operands = 0 : i64, tpu.core_type = #tpu.core_type<tc>, window_params = [{pipeline_mode = #tpu.pipeline_mode<synchronous>, transform_indices = @transform_0, window_bounds = array<i64: 8, 512>}, {pipeline_mode = #tpu.pipeline_mode<synchronous>, transform_indices = @transform_1, window_bounds = array<i64: 8, 128>}, {pipeline_mode = #tpu.pipeline_mode<synchronous>, transform_indices = @transform_2, window_bounds = array<i64: 4, 8, 8>}, {pipeline_mode = #tpu.pipeline_mode<synchronous>, transform_indices = @transform_3, window_bounds = array<i64: 128, 512>}, {pipeline_mode = #tpu.pipeline_mode<synchronous>, transform_indices = @transform_4, window_bounds = array<i64: 8, 512>}]} {
    %c0 = arith.constant 0 : index
    %c0_0 = arith.constant 0 : index
    %0 = vector.load %arg1[%c0, %c0_0] : memref<8x512xbf16, #tpu.memory_space<vmem>>, vector<8x512xbf16>
    %c0_1 = arith.constant 0 : index
    %c0_2 = arith.constant 0 : index
    %c0_3 = arith.constant 0 : index
    %1 = vector.load %arg3[%c0_1, %c0_2, %c0_3] : memref<4x8x8xbf16, #tpu.memory_space<vmem>>, vector<1x8x8xbf16>
    %2 = vector.shape_cast %1 : vector<1x8x8xbf16> to vector<8x8xbf16>
    %cst = arith.constant dense<0.000000e+00> : vector<8x512xf32>
    %3 = tpu.matmul %2, %0, %cst {dimension_numbers = #tpu.dot_dimension_numbers<[1], [0], [0], [1], [0, 0, 1, 1], [], []>} : vector<8x8xbf16>, vector<8x512xbf16>, vector<8x512xf32> -> vector<8x512xf32>
    %cst_4 = arith.constant 0.000000e+00 : f32
    %4 = vector.broadcast %cst_4 : f32 to vector<8x512xf32>
    %5 = arith.maximumf %3, %4 : vector<8x512xf32>
    %6 = arith.truncf %5 : vector<8x512xf32> to vector<8x512xbf16>
    %c1 = arith.constant 1 : index
    %c0_5 = arith.constant 0 : index
    %c0_6 = arith.constant 0 : index
    %7 = vector.load %arg3[%c1, %c0_5, %c0_6] : memref<4x8x8xbf16, #tpu.memory_space<vmem>>, vector<1x8x8xbf16>
    %8 = vector.shape_cast %7 : vector<1x8x8xbf16> to vector<8x8xbf16>
    %cst_7 = arith.constant dense<0.000000e+00> : vector<8x512xf32>
    %9 = tpu.matmul %8, %6, %cst_7 {dimension_numbers = #tpu.dot_dimension_numbers<[1], [0], [0], [1], [0, 0, 1, 1], [], []>} : vector<8x8xbf16>, vector<8x512xbf16>, vector<8x512xf32> -> vector<8x512xf32>
    %cst_8 = arith.constant 0.000000e+00 : f32
    %10 = vector.broadcast %cst_8 : f32 to vector<8x512xf32>
    %11 = arith.maximumf %9, %10 : vector<8x512xf32>
    %c0_9 = arith.constant 0 : index
    %c0_10 = arith.constant 0 : index
    %12 = vector.load %arg2[%c0_9, %c0_10] : memref<8x128xbf16, #tpu.memory_space<vmem>>, vector<8x128xbf16>
    %c2 = arith.constant 2 : index
    %c0_11 = arith.constant 0 : index
    %c0_12 = arith.constant 0 : index
    %13 = vector.load %arg3[%c2, %c0_11, %c0_12] : memref<4x8x8xbf16, #tpu.memory_space<vmem>>, vector<1x8x8xbf16>
    %14 = vector.shape_cast %13 : vector<1x8x8xbf16> to vector<8x8xbf16>
    %cst_13 = arith.constant dense<0.000000e+00> : vector<8x128xf32>
    %15 = tpu.matmul %14, %12, %cst_13 {dimension_numbers = #tpu.dot_dimension_numbers<[1], [0], [0], [1], [0, 0, 1, 1], [], []>} : vector<8x8xbf16>, vector<8x128xbf16>, vector<8x128xf32> -> vector<8x128xf32>
    %cst_14 = arith.constant 0.000000e+00 : f32
    %16 = vector.broadcast %cst_14 : f32 to vector<8x128xf32>
    %17 = arith.maximumf %15, %16 : vector<8x128xf32>
    %18 = arith.truncf %17 : vector<8x128xf32> to vector<8x128xbf16>
    %c3 = arith.constant 3 : index
    %c0_15 = arith.constant 0 : index
    %c0_16 = arith.constant 0 : index
    %19 = vector.load %arg3[%c3, %c0_15, %c0_16] : memref<4x8x8xbf16, #tpu.memory_space<vmem>>, vector<1x8x8xbf16>
    %20 = vector.shape_cast %19 : vector<1x8x8xbf16> to vector<8x8xbf16>
    %cst_17 = arith.constant dense<0.000000e+00> : vector<8x128xf32>
    %21 = tpu.matmul %20, %18, %cst_17 {dimension_numbers = #tpu.dot_dimension_numbers<[1], [0], [0], [1], [0, 0, 1, 1], [], []>} : vector<8x8xbf16>, vector<8x128xbf16>, vector<8x128xf32> -> vector<8x128xf32>
    %cst_18 = arith.constant 0.000000e+00 : f32
    %22 = vector.broadcast %cst_18 : f32 to vector<8x128xf32>
    %23 = arith.maximumf %21, %22 : vector<8x128xf32>
    %24 = arith.truncf %23 : vector<8x128xf32> to vector<8x128xbf16>
    %c0_19 = arith.constant 0 : index
    %c0_20 = arith.constant 0 : index
    %25 = vector.load %arg4[%c0_19, %c0_20] : memref<128x512xbf16, #tpu.memory_space<vmem>>, vector<128x512xbf16>
    %cst_21 = arith.constant dense<0.000000e+00> : vector<8x512xf32>
    %26 = tpu.matmul %24, %25, %cst_21 {dimension_numbers = #tpu.dot_dimension_numbers<[1], [0], [0], [1], [0, 0, 1, 1], [], []>} : vector<8x128xbf16>, vector<128x512xbf16>, vector<8x512xf32> -> vector<8x512xf32>
    %27 = arith.addf %11, %26 : vector<8x512xf32>
    %c0_22 = arith.constant 0 : index
    %c0_23 = arith.constant 0 : index
    %28 = vector.load %arg5[%c0_22, %c0_23] : memref<8x512xf32, #tpu.memory_space<vmem>>, vector<8x512xf32>
    tpu.vector_store %arg5[%c0_22, %c0_23], %27 {strides = array<i32>} : memref<8x512xf32, #tpu.memory_space<vmem>>, vector<8x512xf32>,
    return
  }
  func.func @transform_0(%arg0: i32) -> (i32, i32) {
    %c0_i32 = arith.constant 0 : i32
    %c0_i32_0 = arith.constant 0 : i32
    %c0_i32_1 = arith.constant 0 : i32
    return %c0_i32, %c0_i32_0 : i32, i32
  }
  func.func @transform_1(%arg0: i32) -> (i32, i32) {
    %c0_i32 = arith.constant 0 : i32
    %c0_i32_0 = arith.constant 0 : i32
    %c0_i32_1 = arith.constant 0 : i32
    return %c0_i32, %c0_i32_0 : i32, i32
  }
  func.func @transform_2(%arg0: i32) -> (i32, i32, i32) {
    %c0_i32 = arith.constant 0 : i32
    %c0_i32_0 = arith.constant 0 : i32
    %c0_i32_1 = arith.constant 0 : i32
    %c0_i32_2 = arith.constant 0 : i32
    return %c0_i32, %c0_i32_0, %c0_i32_1 : i32, i32, i32
  }
  func.func @transform_3(%arg0: i32) -> (i32, i32) {
    %c0_i32 = arith.constant 0 : i32
    %c0_i32_0 = arith.constant 0 : i32
    %c0_i32_1 = arith.constant 0 : i32
    return %c0_i32, %c0_i32_0 : i32, i32
  }
  func.func @transform_4(%arg0: i32) -> (i32, i32) {
    %c0_i32 = arith.constant 0 : i32
    %c0_i32_0 = arith.constant 0 : i32
    %c0_i32_1 = arith.constant 0 : i32
    return %c0_i32, %c0_i32_0 : i32, i32
  }
}

</mosaic_0001>

<llo_original>
// kernel: forward.1
$region0: #{forward.1}
  #allocation0 [shape = 'u32[]', space=smem, size = 0x4, offset = 0x4, fixed_abs, tag = 'smem constant byte address 0x4 - core index']
  #allocation1 [shape = 'u32[72,128]{1,0:T(1,128)}', space=vmem, size = 0x9000, scoped, tag = 'internal scratch']
  %s0 = inlined_call_operand.vmem [shape: bf16[8,512], index: 0, kind: input, shape index: {}]
  %s1 = inlined_call_operand.vmem [shape: bf16[8,128], index: 1, kind: input, shape index: {}]
  %s2 = inlined_call_operand.vmem [shape: bf16[4,8,8], index: 2, kind: input, shape index: {}]
  %s3 = inlined_call_operand.vmem [shape: bf16[128,512], index: 3, kind: input, shape index: {}]
  %s4 = inlined_call_operand.vmem [shape: f32[8,512], index: 4, kind: output, shape index: {}]
  %s5 = sld [smem:[#allocation0]]
  $region26: #{forward.1} parent=0
    _
  %s7 = ssub.s32 1, %s5
  %s8 = scalar_select 0, %s7, %s5
  // Predicated region
  $region2: #{forward.1} parent=0 // pred_check
    _
  $region3: #{forward.1} parent=0 // pred_check_branch
    %10 = sbr.rel (0) target = $region5
  $region4: #{forward.1} parent=0 // pred_region
    _
  $region5: #{forward.1} parent=0 // pred_fallthru
    _
  // Predicated region
  $region6: #{forward.1} parent=0 // pred_check
    _
  $region7: #{forward.1} parent=0 // pred_check_branch
    %12 = sbr.rel (0) target = $region9
  $region8: #{forward.1} parent=0 // pred_region
    _
  $region9: #{forward.1} parent=0 // pred_fallthru
    _
  // Predicated region
  $region10: #{forward.1} parent=0 // pred_check
    _
  $region11: #{forward.1} parent=0 // pred_check_branch
    %14 = sbr.rel (0) target = $region13
  $region12: #{forward.1} parent=0 // pred_region
    _
  $region13: #{forward.1} parent=0 // pred_fallthru
    _
  // Predicated region
  $region14: #{forward.1} parent=0 // pred_check
    _
  $region15: #{forward.1} parent=0 // pred_check_branch
    %16 = sbr.rel (0) target = $region17
  $region16: #{forward.1} parent=0 // pred_region
    _
  $region17: #{forward.1} parent=0 // pred_fallthru
    _
  %v18 = vld [vmem:[%s0] sm:$0xff]
  %v19 = vld [vmem:[%s0 + $0x8] sm:$0xff]
  %v20 = vld [vmem:[%s2] sm:$0xf]
  %v23 = vunpack.c.l.b16 %v18
  %v24 = vunpack.c.h.b16 %v18
  %v25 = vunpack.c.l.b16 %v19
  %v26 = vunpack.c.h.b16 %v19
  %v27 = vpack.c.b16 %v23, %v23
  %v28 = vpack.c.b16 %v24, %v24
  %v29 = vpack.c.b16 %v25, %v25
  %v30 = vpack.c.b16 %v26, %v26
  %vm31 = vcmask 64512
  %v33 = vsel %vm31, %v20, 0
  %vm35 = vcmask 1043456
  %v37 = vsel %vm35, %v27, 0
  %v40 = vsel %vm35, %v28, 0
  %v43 = vsel %vm35, %v29, 0
  %v46 = vsel %vm35, %v30, 0
  %48 = vmatpush.bf16.msra.mxu0 0
  %49 = vmatpush.bf16.msra.mxu0 0
  %50 = vmatpush.bf16.msra.mxu0 0
  %51 = vmatpush.bf16.msra.mxu0 0
  %52 = vmatpush.bf16.msra.mxu0 0
  %53 = vmatpush.bf16.msra.mxu0 0
  %54 = vmatpush.bf16.msra.mxu0 0
  %55 = vmatpush.bf16.msra.mxu0 %v37
  %56 = vmatmul.bf16.gmra.mxu0 %v33
  %v57 = vpop.f32.mrf.mxu0
  %v58 = vadd.f32 0.0, %v57
  %v59 = vpop.f32.mrf.mxu0
  %60 = vdwg.mxu0
  %61 = vmatpush.bf16.msra.mxu0 0
  %62 = vmatpush.bf16.msra.mxu0 0
  %63 = vmatpush.bf16.msra.mxu0 0
  %64 = vmatpush.bf16.msra.mxu0 0
  %65 = vmatpush.bf16.msra.mxu0 0
  %66 = vmatpush.bf16.msra.mxu0 0
  %67 = vmatpush.bf16.msra.mxu0 0
  %68 = vmatpush.bf16.msra.mxu0 %v40
  %69 = vmatmul.bf16.gmra.mxu0 %v33
  %v70 = vpop.f32.mrf.mxu0
  %v71 = vadd.f32 0.0, %v70
  %v72 = vpop.f32.mrf.mxu0
  %73 = vdwg.mxu0
  %74 = vmatpush.bf16.msra.mxu0 0
  %75 = vmatpush.bf16.msra.mxu0 0
  %76 = vmatpush.bf16.msra.mxu0 0
  %77 = vmatpush.bf16.msra.mxu0 0
  %78 = vmatpush.bf16.msra.mxu0 0
  %79 = vmatpush.bf16.msra.mxu0 0
  %80 = vmatpush.bf16.msra.mxu0 0
  %81 = vmatpush.bf16.msra.mxu0 %v43
  %82 = vmatmul.bf16.gmra.mxu0 %v33
  %v83 = vpop.f32.mrf.mxu0
  %v84 = vadd.f32 0.0, %v83
  %v85 = vpop.f32.mrf.mxu0
  %86 = vdwg.mxu0
  %87 = vmatpush.bf16.msra.mxu0 0
  %88 = vmatpush.bf16.msra.mxu0 0
  %89 = vmatpush.bf16.msra.mxu0 0
  %90 = vmatpush.bf16.msra.mxu0 0
  %91 = vmatpush.bf16.msra.mxu0 0
  %92 = vmatpush.bf16.msra.mxu0 0
  %93 = vmatpush.bf16.msra.mxu0 0
  %94 = vmatpush.bf16.msra.mxu0 %v46
  %95 = vmatmul.bf16.gmra.mxu0 %v33
  %v96 = vpop.f32.mrf.mxu0
  %v97 = vadd.f32 0.0, %v96
  %v98 = vpop.f32.mrf.mxu0
  %99 = vdwg.mxu0
  %v100 = vmax.f32 %v58, 0.0
  %v101 = vmax.f32 %v71, 0.0
  %v102 = vmax.f32 %v84, 0.0
  %v103 = vmax.f32 %v97, 0.0
  %v104 = vpack.c.bf16 %v100, %v100
  %v105 = vpack.c.bf16 %v101, %v101
  %v106 = vpack.c.bf16 %v102, %v102
  %v107 = vpack.c.bf16 %v103, %v103
  %s108 = scalar_lea.vmem %s2, 4
  %v109 = vld [vmem:[%s108] sm:$0xf]
  %v111 = vsel %vm31, %v109, 0
  %v114 = vsel %vm35, %v104, 0
  %v117 = vsel %vm35, %v105, 0
  %v120 = vsel %vm35, %v106, 0
  %v123 = vsel %vm35, %v107, 0
  %125 = vmatpush.bf16.msra.mxu0 0
  %126 = vmatpush.bf16.msra.mxu0 0
  %127 = vmatpush.bf16.msra.mxu0 0
  %128 = vmatpush.bf16.msra.mxu0 0
  %129 = vmatpush.bf16.msra.mxu0 0
  %130 = vmatpush.bf16.msra.mxu0 0
  %131 = vmatpush.bf16.msra.mxu0 0
  %132 = vmatpush.bf16.msra.mxu0 %v114
  %133 = vmatmul.bf16.gmra.mxu0 %v111
  %v134 = vpop.f32.mrf.mxu0
  %v135 = vadd.f32 0.0, %v134
  %v136 = vpop.f32.mrf.mxu0
  %137 = vdwg.mxu0
  %138 = vmatpush.bf16.msra.mxu0 0
  %139 = vmatpush.bf16.msra.mxu0 0
  %140 = vmatpush.bf16.msra.mxu0 0
  %141 = vmatpush.bf16.msra.mxu0 0
  %142 = vmatpush.bf16.msra.mxu0 0
  %143 = vmatpush.bf16.msra.mxu0 0
  %144 = vmatpush.bf16.msra.mxu0 0
  %145 = vmatpush.bf16.msra.mxu0 %v117
  %146 = vmatmul.bf16.gmra.mxu0 %v111
  %v147 = vpop.f32.mrf.mxu0
  %v148 = vadd.f32 0.0, %v147
  %v149 = vpop.f32.mrf.mxu0
  %150 = vdwg.mxu0
  %151 = vmatpush.bf16.msra.mxu0 0
  %152 = vmatpush.bf16.msra.mxu0 0
  %153 = vmatpush.bf16.msra.mxu0 0
  %154 = vmatpush.bf16.msra.mxu0 0
  %155 = vmatpush.bf16.msra.mxu0 0
  %156 = vmatpush.bf16.msra.mxu0 0
  %157 = vmatpush.bf16.msra.mxu0 0
  %158 = vmatpush.bf16.msra.mxu0 %v120
  %159 = vmatmul.bf16.gmra.mxu0 %v111
  %v160 = vpop.f32.mrf.mxu0
  %v161 = vadd.f32 0.0, %v160
  %v162 = vpop.f32.mrf.mxu0
  %163 = vdwg.mxu0
  %164 = vmatpush.bf16.msra.mxu0 0
  %165 = vmatpush.bf16.msra.mxu0 0
  %166 = vmatpush.bf16.msra.mxu0 0
  %167 = vmatpush.bf16.msra.mxu0 0
  %168 = vmatpush.bf16.msra.mxu0 0
  %169 = vmatpush.bf16.msra.mxu0 0
  %170 = vmatpush.bf16.msra.mxu0 0
  %171 = vmatpush.bf16.msra.mxu0 %v123
  %172 = vmatmul.bf16.gmra.mxu0 %v111
  %v173 = vpop.f32.mrf.mxu0
  %v174 = vadd.f32 0.0, %v173
  %v175 = vpop.f32.mrf.mxu0
  %176 = vdwg.mxu0
  %v177 = vmax.f32 %v135, 0.0
  %v178 = vmax.f32 %v148, 0.0
  %v179 = vmax.f32 %v161, 0.0
  %v180 = vmax.f32 %v174, 0.0
  %v181 = vld [vmem:[%s1] sm:$0xf]
  %s182 = scalar_lea.vmem %s2, 8
  %v183 = vld [vmem:[%s182] sm:$0xf]
  %v185 = vsel %vm31, %v183, 0
  %v188 = vsel %vm35, %v181, 0
  %190 = vmatpush.bf16.msra.mxu0 0
  %191 = vmatpush.bf16.msra.mxu0 0
  %192 = vmatpush.bf16.msra.mxu0 0
  %193 = vmatpush.bf16.msra.mxu0 0
  %194 = vmatpush.bf16.msra.mxu0 0
  %195 = vmatpush.bf16.msra.mxu0 0
  %196 = vmatpush.bf16.msra.mxu0 0
  %197 = vmatpush.bf16.msra.mxu0 %v188
  %198 = vmatmul.bf16.gmra.mxu0 %v185
  %v199 = vpop.f32.mrf.mxu0
  %v200 = vadd.f32 0.0, %v199
  %v201 = vpop.f32.mrf.mxu0
  %202 = vdwg.mxu0
  %v203 = vmax.f32 %v200, 0.0
  %v204 = vpack.c.bf16 %v203, %v203
  %s205 = scalar_lea.vmem %s2, 12
  %v206 = vld [vmem:[%s205] sm:$0xf]
  %v208 = vsel %vm31, %v206, 0
  %v211 = vsel %vm35, %v204, 0
  %213 = vmatpush.bf16.msra.mxu0 0
  %214 = vmatpush.bf16.msra.mxu0 0
  %215 = vmatpush.bf16.msra.mxu0 0
  %216 = vmatpush.bf16.msra.mxu0 0
  %217 = vmatpush.bf16.msra.mxu0 0
  %218 = vmatpush.bf16.msra.mxu0 0
  %219 = vmatpush.bf16.msra.mxu0 0
  %220 = vmatpush.bf16.msra.mxu0 %v211
  %221 = vmatmul.bf16.gmra.mxu0 %v208
  %v222 = vpop.f32.mrf.mxu0
  %v223 = vadd.f32 0.0, %v222
  %v224 = vpop.f32.mrf.mxu0
  %225 = vdwg.mxu0
  %v226 = vmax.f32 %v223, 0.0
  %v227 = vpack.c.bf16 %v226, %v226
  %v228 = vld [vmem:[%s3] sm:$0xff]
  %v229 = vld [vmem:[%s3 + $0x8] sm:$0xff]
  %v230 = vld [vmem:[%s3 + $0x10] sm:$0xff]
  %v231 = vld [vmem:[%s3 + $0x18] sm:$0xff]
  %v232 = vld [vmem:[%s3 + $0x20] sm:$0xff]
  %v233 = vld [vmem:[%s3 + $0x28] sm:$0xff]
  %v234 = vld [vmem:[%s3 + $0x30] sm:$0xff]
  %v235 = vld [vmem:[%s3 + $0x38] sm:$0xff]
  %v236 = vld [vmem:[%s3 + $0x40] sm:$0xff]
  %v237 = vld [vmem:[%s3 + $0x48] sm:$0xff]
  %v238 = vld [vmem:[%s3 + $0x50] sm:$0xff]
  %v239 = vld [vmem:[%s3 + $0x58] sm:$0xff]
  %v240 = vld [vmem:[%s3 + $0x60] sm:$0xff]
  %v241 = vld [vmem:[%s3 + $0x68] sm:$0xff]
  %v242 = vld [vmem:[%s3 + $0x70] sm:$0xff]
  %v243 = vld [vmem:[%s3 + $0x78] sm:$0xff]
  %v244 = vld [vmem:[%s3 + $0x80] sm:$0xff]
  %v245 = vld [vmem:[%s3 + $0x88] sm:$0xff]
  %v246 = vld [vmem:[%s3 + $0x90] sm:$0xff]
  %v247 = vld [vmem:[%s3 + $0x98] sm:$0xff]
  %v248 = vld [vmem:[%s3 + $0xa0] sm:$0xff]
  %v249 = vld [vmem:[%s3 + $0xa8] sm:$0xff]
  %v250 = vld [vmem:[%s3 + $0xb0] sm:$0xff]
  %v251 = vld [vmem:[%s3 + $0xb8] sm:$0xff]
  %v252 = vld [vmem:[%s3 + $0xc0] sm:$0xff]
  %v253 = vld [vmem:[%s3 + $0xc8] sm:$0xff]
  %v254 = vld [vmem:[%s3 + $0xd0] sm:$0xff]
  %v255 = vld [vmem:[%s3 + $0xd8] sm:$0xff]
  %v256 = vld [vmem:[%s3 + $0xe0] sm:$0xff]
  %v257 = vld [vmem:[%s3 + $0xe8] sm:$0xff]
  %v258 = vld [vmem:[%s3 + $0xf0] sm:$0xff]
  %v259 = vld [vmem:[%s3 + $0xf8] sm:$0xff]
  %v292 = vunpack.c.l.b16 %v228
  %v293 = vunpack.c.h.b16 %v228
  %v294 = vunpack.c.l.b16 %v229
  %v295 = vunpack.c.h.b16 %v229
  %v296 = vunpack.c.l.b16 %v230
  %v297 = vunpack.c.h.b16 %v230
  %v298 = vunpack.c.l.b16 %v231
  %v299 = vunpack.c.h.b16 %v231
  %v300 = vunpack.c.l.b16 %v232
  %v301 = vunpack.c.h.b16 %v232
  %v302 = vunpack.c.l.b16 %v233
  %v303 = vunpack.c.h.b16 %v233
  %v304 = vunpack.c.l.b16 %v234
  %v305 = vunpack.c.h.b16 %v234
  %v306 = vunpack.c.l.b16 %v235
  %v307 = vunpack.c.h.b16 %v235
  %v308 = vunpack.c.l.b16 %v236
  %v309 = vunpack.c.h.b16 %v236
  %v310 = vunpack.c.l.b16 %v237
  %v311 = vunpack.c.h.b16 %v237
  %v312 = vunpack.c.l.b16 %v238
  %v313 = vunpack.c.h.b16 %v238
  %v314 = vunpack.c.l.b16 %v239
  %v315 = vunpack.c.h.b16 %v239
  %v316 = vunpack.c.l.b16 %v240
  %v317 = vunpack.c.h.b16 %v240
  %v318 = vunpack.c.l.b16 %v241
  %v319 = vunpack.c.h.b16 %v241
  %v320 = vunpack.c.l.b16 %v242
  %v321 = vunpack.c.h.b16 %v242
  %v322 = vunpack.c.l.b16 %v243
  %v323 = vunpack.c.h.b16 %v243
  %v324 = vunpack.c.l.b16 %v244
  %v325 = vunpack.c.h.b16 %v244
  %v326 = vunpack.c.l.b16 %v245
  %v327 = vunpack.c.h.b16 %v245
  %v328 = vunpack.c.l.b16 %v246
  %v329 = vunpack.c.h.b16 %v246
  %v330 = vunpack.c.l.b16 %v247
  %v331 = vunpack.c.h.b16 %v247
  %v332 = vunpack.c.l.b16 %v248
  %v333 = vunpack.c.h.b16 %v248
  %v334 = vunpack.c.l.b16 %v249
  %v335 = vunpack.c.h.b16 %v249
  %v336 = vunpack.c.l.b16 %v250
  %v337 = vunpack.c.h.b16 %v250
  %v338 = vunpack.c.l.b16 %v251
  %v339 = vunpack.c.h.b16 %v251
  %v340 = vunpack.c.l.b16 %v252
  %v341 = vunpack.c.h.b16 %v252
  %v342 = vunpack.c.l.b16 %v253
  %v343 = vunpack.c.h.b16 %v253
  %v344 = vunpack.c.l.b16 %v254
  %v345 = vunpack.c.h.b16 %v254
  %v346 = vunpack.c.l.b16 %v255
  %v347 = vunpack.c.h.b16 %v255
  %v348 = vunpack.c.l.b16 %v256
  %v349 = vunpack.c.h.b16 %v256
  %v350 = vunpack.c.l.b16 %v257
  %v351 = vunpack.c.h.b16 %v257
  %v352 = vunpack.c.l.b16 %v258
  %v353 = vunpack.c.h.b16 %v258
  %v354 = vunpack.c.l.b16 %v259
  %v355 = vunpack.c.h.b16 %v259
  %v356 = vpack.c.b16 %v296, %v292
  %v357 = vpack.c.b16 %v297, %v293
  %v358 = vpack.c.b16 %v298, %v294
  %v359 = vpack.c.b16 %v299, %v295
  %v360 = vpack.c.b16 %v304, %v300
  %v361 = vpack.c.b16 %v305, %v301
  %v362 = vpack.c.b16 %v306, %v302
  %v363 = vpack.c.b16 %v307, %v303
  %v364 = vpack.c.b16 %v312, %v308
  %v365 = vpack.c.b16 %v313, %v309
  %v366 = vpack.c.b16 %v314, %v310
  %v367 = vpack.c.b16 %v315, %v311
  %v368 = vpack.c.b16 %v320, %v316
  %v369 = vpack.c.b16 %v321, %v317
  %v370 = vpack.c.b16 %v322, %v318
  %v371 = vpack.c.b16 %v323, %v319
  %v372 = vpack.c.b16 %v328, %v324
  %v373 = vpack.c.b16 %v329, %v325
  %v374 = vpack.c.b16 %v330, %v326
  %v375 = vpack.c.b16 %v331, %v327
  %v376 = vpack.c.b16 %v336, %v332
  %v377 = vpack.c.b16 %v337, %v333
  %v378 = vpack.c.b16 %v338, %v334
  %v379 = vpack.c.b16 %v339, %v335
  %v380 = vpack.c.b16 %v344, %v340
  %v381 = vpack.c.b16 %v345, %v341
  %v382 = vpack.c.b16 %v346, %v342
  %v383 = vpack.c.b16 %v347, %v343
  %v384 = vpack.c.b16 %v352, %v348
  %v385 = vpack.c.b16 %v353, %v349
  %v386 = vpack.c.b16 %v354, %v350
  %v387 = vpack.c.b16 %v355, %v351
  %420 = vmatpush.bf16.msra.mxu0 %v384
  %421 = vmatpush.bf16.msra.mxu0 %v380
  %422 = vmatpush.bf16.msra.mxu0 %v376
  %423 = vmatpush.bf16.msra.mxu0 %v372
  %424 = vmatpush.bf16.msra.mxu0 %v368
  %425 = vmatpush.bf16.msra.mxu0 %v364
  %426 = vmatpush.bf16.msra.mxu0 %v360
  %427 = vmatpush.bf16.msra.mxu0 %v356
  %428 = vmatmul.bf16.gmra.mxu0 %v227
  %v429 = vpop.f32.mrf.mxu0
  %v430 = vadd.f32 0.0, %v429
  %v431 = vpop.f32.mrf.mxu0
  %432 = vdwg.mxu0
  %433 = vmatpush.bf16.msra.mxu0 %v385
  %434 = vmatpush.bf16.msra.mxu0 %v381
  %435 = vmatpush.bf16.msra.mxu0 %v377
  %436 = vmatpush.bf16.msra.mxu0 %v373
  %437 = vmatpush.bf16.msra.mxu0 %v369
  %438 = vmatpush.bf16.msra.mxu0 %v365
  %439 = vmatpush.bf16.msra.mxu0 %v361
  %440 = vmatpush.bf16.msra.mxu0 %v357
  %441 = vmatmul.bf16.gmra.mxu0 %v227
  %v442 = vpop.f32.mrf.mxu0
  %v443 = vadd.f32 0.0, %v442
  %v444 = vpop.f32.mrf.mxu0
  %445 = vdwg.mxu0
  %446 = vmatpush.bf16.msra.mxu0 %v386
  %447 = vmatpush.bf16.msra.mxu0 %v382
  %448 = vmatpush.bf16.msra.mxu0 %v378
  %449 = vmatpush.bf16.msra.mxu0 %v374
  %450 = vmatpush.bf16.msra.mxu0 %v370
  %451 = vmatpush.bf16.msra.mxu0 %v366
  %452 = vmatpush.bf16.msra.mxu0 %v362
  %453 = vmatpush.bf16.msra.mxu0 %v358
  %454 = vmatmul.bf16.gmra.mxu0 %v227
  %v455 = vpop.f32.mrf.mxu0
  %v456 = vadd.f32 0.0, %v455
  %v457 = vpop.f32.mrf.mxu0
  %458 = vdwg.mxu0
  %459 = vmatpush.bf16.msra.mxu0 %v387
  %460 = vmatpush.bf16.msra.mxu0 %v383
  %461 = vmatpush.bf16.msra.mxu0 %v379
  %462 = vmatpush.bf16.msra.mxu0 %v375
  %463 = vmatpush.bf16.msra.mxu0 %v371
  %464 = vmatpush.bf16.msra.mxu0 %v367
  %465 = vmatpush.bf16.msra.mxu0 %v363
  %466 = vmatpush.bf16.msra.mxu0 %v359
  %467 = vmatmul.bf16.gmra.mxu0 %v227
  %v468 = vpop.f32.mrf.mxu0
  %v469 = vadd.f32 0.0, %v468
  %v470 = vpop.f32.mrf.mxu0
  %471 = vdwg.mxu0
  %v472 = vadd.f32 %v177, %v430
  %v473 = vadd.f32 %v178, %v443
  %v474 = vadd.f32 %v179, %v456
  %v475 = vadd.f32 %v180, %v469
  %476 = vst [vmem:[%s4] sm:$0xff] %v472
  %477 = vst [vmem:[%s4 + $0x8] sm:$0xff] %v473
  %478 = vst [vmem:[%s4 + $0x10] sm:$0xff] %v474
  %479 = vst [vmem:[%s4 + $0x18] sm:$0xff] %v475
  // Predicated region
  $region18: #{forward.1} parent=0 // pred_check
    _
  $region19: #{forward.1} parent=0 // pred_check_branch
    %481 = sbr.rel (0) target = $region21
  $region20: #{forward.1} parent=0 // pred_region
    _
  $region21: #{forward.1} parent=0 // pred_fallthru
    _
  // Predicated region
  $region22: #{forward.1} parent=0 // pred_check
    _
  $region23: #{forward.1} parent=0 // pred_check_branch
    %483 = sbr.rel (0) target = $region25
  $region24: #{forward.1} parent=0 // pred_region
    _
  $region25: #{forward.1} parent=0 // pred_fallthru
    _

</llo_original>
